<compile_context>
chip_gen: v5e
topology: v5e:2x2
jax: 0.10.0
libtpu: 0.0.40
codegen_flags: <defaults>
</compile_context>

<pallas_src>
import jax
import jax.numpy as jnp
from jax.experimental import pallas as pl
from jax.experimental.pallas import tpu as pltpu

_LANES = 128
_ROW_ALIGN = 16   # multiple of both the f32 (8,128) and bf16 (16,128) tiles


def _make_kernel(c_in, c_out):
    # TODO(synk): for larger heads (roughly C_in*C_out >= 32) switch to an MXU
    # path (spatial-major (tr*128, C_in) tile @ resident (C_in, C_out) weight)
    # to stay at the memory roofline; the VPU MAC below targets tiny C<=8
    # passthru heads.
    def kernel(w_ref, b_ref, x_ref, o_ref):
        # w_ref: (C_out, C_in) f32 SMEM (scalar-prefetched)
        # b_ref: (C_out,)      f32 SMEM
        # x_ref: (C_in,  TR, 128) VMEM tile
        # o_ref: (C_out, TR, 128) VMEM tile
        for o in range(c_out):
            acc = x_ref[0].astype(jnp.float32) * w_ref[o, 0] + b_ref[o]
            for c in range(1, c_in):
                acc = acc + x_ref[c].astype(jnp.float32) * w_ref[o, c]
            # sigmoid(a) = 1 / (1 + exp(-a)); exp goes to the EUP and the
            # approximate reciprocal avoids a VALU divide.
            e = jnp.exp(-acc)
            o_ref[o] = pl.reciprocal(1.0 + e, approx=True).astype(o_ref.dtype)

    return kernel


def passthru_generator_forward(x_nchw, weight, bias, *,
                               block_bytes=4 * 1024 * 1024):
    """sigmoid(conv1x1(x)) fused into a single Pallas kernel, native NCHW.

    x_nchw : (N, C_in, H, W) float32 or bfloat16
    weight : (C_out, C_in)   float32  (1x1 conv kernel, squeezed)
    bias   : (C_out,)        float32
    returns: (N, C_out, H, W) same dtype as x
    """
    N, C_in, H, W = x_nchw.shape
    C_out, C_in_w = weight.shape
    assert C_in_w == C_in
    S = H * W
    itemsize = jnp.dtype(x_nchw.dtype).itemsize

    # Spatial axis viewed as rows of 128 lanes.  Pad only to the 128-lane
    # boundary (no-op when H*W % 128 == 0 -- the common case).
    s_rows = pl.cdiv(S, _LANES)
    S128 = s_rows * _LANES

    x3 = x_nchw.reshape(N, C_in, S)
    if S128 != S:
        x3 = jnp.pad(x3, ((0, 0), (0, 0), (0, S128 - S)))
    x4 = x3.reshape(N, C_in, s_rows, _LANES)      # free reshape

    # Rows per block: size from the combined in+out per-step footprint so the
    # double-buffered pipeline (in + out blocks, 2 buffers each) stays well
    # under the 32 MiB scoped-VMEM budget on all generations.  (v5e/v6e could
    # take larger tiles; ~4 MiB combined already amortizes per-step overhead.)
    tr = block_bytes // ((C_in + C_out) * _LANES * itemsize)
    tr = max(_ROW_ALIGN, (tr // _ROW_ALIGN) * _ROW_ALIGN)
    if tr >= s_rows:
        tr = s_rows                       # block == full axis (always allowed)
    n_sp = pl.cdiv(s_rows, tr)            # ragged last block is masked by Pallas

    w = weight.astype(jnp.float32)
    b = bias.astype(jnp.float32)

    out4 = pl.pallas_call(
        _make_kernel(C_in, C_out),
        out_shape=jax.ShapeDtypeStruct((N, C_out, s_rows, _LANES),
                                       x_nchw.dtype),
        grid_spec=pltpu.PrefetchScalarGridSpec(
            num_scalar_prefetch=2,                    # weight, bias -> SMEM
            # Spatial axis leads so the megacore split (v7x) lands on the big
            # axis even at batch 1-2; both axes independent -> "parallel".
            grid=(n_sp, N),
            in_specs=[
                pl.BlockSpec((None, C_in, tr, _LANES),
                             lambda s, n, w_ref, b_ref: (n, 0, s, 0)),
            ],
            out_specs=pl.BlockSpec((None, C_out, tr, _LANES),
                                   lambda s, n, w_ref, b_ref: (n, 0, s, 0)),
        ),
        compiler_params=pltpu.CompilerParams(
            dimension_semantics=("parallel", "parallel"),
            vmem_limit_bytes=32 * 1024 * 1024,
        ),
        cost_estimate=pl.CostEstimate(
            flops=2 * N * S128 * C_in * C_out,
            transcendentals=N * S128 * C_out,
            bytes_accessed=itemsize * N * S128 * (C_in + C_out),
        ),
    )(w, b, x4)

    out = out4.reshape(N, C_out, S128)
    if S128 != S:
        out = out[:, :, :S]
    return out.reshape(N, C_out, H, W)


if __name__ == "__main__":
    key = jax.random.PRNGKey(0)
    kx, kw, kb = jax.random.split(key, 3)

    N, C_in, C_out, H, W = 2, 4, 4, 16, 16
    x = jax.random.normal(kx, (N, C_in, H, W), dtype=jnp.float32)
    weight = jax.random.normal(kw, (C_out, C_in), dtype=jnp.float32) * 0.1
    bias = jax.random.normal(kb, (C_out,), dtype=jnp.float32) * 0.1

    out = passthru_generator_forward(x, weight, bias)
    out = jax.block_until_ready(out)

    # Reference: plain JAX conv1x1 + sigmoid.  Tolerance loosened vs exact
    # logistic because the kernel uses the EUP approximate reciprocal.
    ref = jax.nn.sigmoid(
        jnp.einsum("nchw,oc->nohw", x, weight) + bias[None, :, None, None]
    )
    assert out.shape == (N, C_out, H, W)
    assert jnp.allclose(out, ref, atol=2e-3, rtol=2e-3)

    print("KERNEL_OK")
</pallas_src>

<mosaic_0001>
module attributes {stable_mosaic.version = 11 : i64} {
  func.func @kernel(%arg0: i32, %arg1: i32, %arg2: memref<4x4xf32, #tpu.memory_space<smem>>, %arg3: memref<4xf32, #tpu.memory_space<smem>>, %arg4: memref<1x4x2x128xf32, #tpu.memory_space<vmem>>, %arg5: memref<1x4x2x128xf32, #tpu.memory_space<vmem>>) attributes {dimension_semantics = [#tpu.dimension_semantics<parallel>, #tpu.dimension_semantics<parallel>], iteration_bounds = array<i64: 1, 2>, scalar_prefetch = 2 : i64, scratch_operands = 0 : i64, tpu.core_type = #tpu.core_type<tc>, window_params = [{transform_indices = @transform_0, window_bounds = array<i64: 1, 4, 2, 128>}, {transform_indices = @transform_1, window_bounds = array<i64: 1, 4, 2, 128>}]} {
    %c0 = arith.constant 0 : index
    %c0_0 = arith.constant 0 : index
    %c0_1 = arith.constant 0 : index
    %c0_2 = arith.constant 0 : index
    %0 = vector.load %arg4[%c0, %c0_0, %c0_1, %c0_2] : memref<1x4x2x128xf32, #tpu.memory_space<vmem>>, vector<1x1x2x128xf32>
    %1 = vector.shape_cast %0 : vector<1x1x2x128xf32> to vector<2x128xf32>
    %c0_3 = arith.constant 0 : index
    %c0_4 = arith.constant 0 : index
    %2 = memref.load %arg2[%c0_3, %c0_4] : memref<4x4xf32, #tpu.memory_space<smem>>
    %3 = vector.broadcast %2 : f32 to vector<2x128xf32>
    %4 = arith.mulf %1, %3 : vector<2x128xf32>
    %c0_5 = arith.constant 0 : index
    %5 = memref.load %arg3[%c0_5] : memref<4xf32, #tpu.memory_space<smem>>
    %6 = vector.broadcast %5 : f32 to vector<2x128xf32>
    %7 = arith.addf %4, %6 : vector<2x128xf32>
    %c0_6 = arith.constant 0 : index
    %c1 = arith.constant 1 : index
    %c0_7 = arith.constant 0 : index
    %c0_8 = arith.constant 0 : index
    %8 = vector.load %arg4[%c0_6, %c1, %c0_7, %c0_8] : memref<1x4x2x128xf32, #tpu.memory_space<vmem>>, vector<1x1x2x128xf32>
    %9 = vector.shape_cast %8 : vector<1x1x2x128xf32> to vector<2x128xf32>
    %c0_9 = arith.constant 0 : index
    %c1_10 = arith.constant 1 : index
    %10 = memref.load %arg2[%c0_9, %c1_10] : memref<4x4xf32, #tpu.memory_space<smem>>
    %11 = vector.broadcast %10 : f32 to vector<2x128xf32>
    %12 = arith.mulf %9, %11 : vector<2x128xf32>
    %13 = arith.addf %7, %12 : vector<2x128xf32>
    %c0_11 = arith.constant 0 : index
    %c2 = arith.constant 2 : index
    %c0_12 = arith.constant 0 : index
    %c0_13 = arith.constant 0 : index
    %14 = vector.load %arg4[%c0_11, %c2, %c0_12, %c0_13] : memref<1x4x2x128xf32, #tpu.memory_space<vmem>>, vector<1x1x2x128xf32>
    %15 = vector.shape_cast %14 : vector<1x1x2x128xf32> to vector<2x128xf32>
    %c0_14 = arith.constant 0 : index
    %c2_15 = arith.constant 2 : index
    %16 = memref.load %arg2[%c0_14, %c2_15] : memref<4x4xf32, #tpu.memory_space<smem>>
    %17 = vector.broadcast %16 : f32 to vector<2x128xf32>
    %18 = arith.mulf %15, %17 : vector<2x128xf32>
    %19 = arith.addf %13, %18 : vector<2x128xf32>
    %c0_16 = arith.constant 0 : index
    %c3 = arith.constant 3 : index
    %c0_17 = arith.constant 0 : index
    %c0_18 = arith.constant 0 : index
    %20 = vector.load %arg4[%c0_16, %c3, %c0_17, %c0_18] : memref<1x4x2x128xf32, #tpu.memory_space<vmem>>, vector<1x1x2x128xf32>
    %21 = vector.shape_cast %20 : vector<1x1x2x128xf32> to vector<2x128xf32>
    %c0_19 = arith.constant 0 : index
    %c3_20 = arith.constant 3 : index
    %22 = memref.load %arg2[%c0_19, %c3_20] : memref<4x4xf32, #tpu.memory_space<smem>>
    %23 = vector.broadcast %22 : f32 to vector<2x128xf32>
    %24 = arith.mulf %21, %23 : vector<2x128xf32>
    %25 = arith.addf %19, %24 : vector<2x128xf32>
    %cst = arith.constant 0.000000e+00 : f32
    %26 = vector.broadcast %cst : f32 to vector<2x128xf32>
    %27 = arith.subf %26, %25 : vector<2x128xf32>
    %28 = math.exp %27 : vector<2x128xf32>
    %cst_21 = arith.constant 1.000000e+00 : f32
    %29 = vector.broadcast %cst_21 : f32 to vector<2x128xf32>
    %30 = arith.addf %29, %28 : vector<2x128xf32>
    %31 = tpu.reciprocal %30 {approx = true} : vector<2x128xf32> -> vector<2x128xf32>
    %c0_22 = arith.constant 0 : index
    %c0_23 = arith.constant 0 : index
    %c0_24 = arith.constant 0 : index
    %c0_25 = arith.constant 0 : index
    %32 = vector.load %arg5[%c0_22, %c0_23, %c0_24, %c0_25] : memref<1x4x2x128xf32, #tpu.memory_space<vmem>>, vector<1x1x2x128xf32>
    %33 = vector.shape_cast %32 : vector<1x1x2x128xf32> to vector<2x128xf32>
    %34 = vector.shape_cast %31 : vector<2x128xf32> to vector<1x1x2x128xf32>
    tpu.vector_store %arg5[%c0_22, %c0_23, %c0_24, %c0_25], %34 {strides = array<i32>} : memref<1x4x2x128xf32, #tpu.memory_space<vmem>>, vector<1x1x2x128xf32>,
    %c0_26 = arith.constant 0 : index
    %c0_27 = arith.constant 0 : index
    %c0_28 = arith.constant 0 : index
    %c0_29 = arith.constant 0 : index
    %35 = vector.load %arg4[%c0_26, %c0_27, %c0_28, %c0_29] : memref<1x4x2x128xf32, #tpu.memory_space<vmem>>, vector<1x1x2x128xf32>
    %36 = vector.shape_cast %35 : vector<1x1x2x128xf32> to vector<2x128xf32>
    %c1_30 = arith.constant 1 : index
    %c0_31 = arith.constant 0 : index
    %37 = memref.load %arg2[%c1_30, %c0_31] : memref<4x4xf32, #tpu.memory_space<smem>>
    %38 = vector.broadcast %37 : f32 to vector<2x128xf32>
    %39 = arith.mulf %36, %38 : vector<2x128xf32>
    %c1_32 = arith.constant 1 : index
    %40 = memref.load %arg3[%c1_32] : memref<4xf32, #tpu.memory_space<smem>>
    %41 = vector.broadcast %40 : f32 to vector<2x128xf32>
    %42 = arith.addf %39, %41 : vector<2x128xf32>
    %c0_33 = arith.constant 0 : index
    %c1_34 = arith.constant 1 : index
    %c0_35 = arith.constant 0 : index
    %c0_36 = arith.constant 0 : index
    %43 = vector.load %arg4[%c0_33, %c1_34, %c0_35, %c0_36] : memref<1x4x2x128xf32, #tpu.memory_space<vmem>>, vector<1x1x2x128xf32>
    %44 = vector.shape_cast %43 : vector<1x1x2x128xf32> to vector<2x128xf32>
    %c1_37 = arith.constant 1 : index
    %c1_38 = arith.constant 1 : index
    %45 = memref.load %arg2[%c1_37, %c1_38] : memref<4x4xf32, #tpu.memory_space<smem>>
    %46 = vector.broadcast %45 : f32 to vector<2x128xf32>
    %47 = arith.mulf %44, %46 : vector<2x128xf32>
    %48 = arith.addf %42, %47 : vector<2x128xf32>
    %c0_39 = arith.constant 0 : index
    %c2_40 = arith.constant 2 : index
    %c0_41 = arith.constant 0 : index
    %c0_42 = arith.constant 0 : index
    %49 = vector.load %arg4[%c0_39, %c2_40, %c0_41, %c0_42] : memref<1x4x2x128xf32, #tpu.memory_space<vmem>>, vector<1x1x2x128xf32>
    %50 = vector.shape_cast %49 : vector<1x1x2x128xf32> to vector<2x128xf32>
    %c1_43 = arith.constant 1 : index
    %c2_44 = arith.constant 2 : index
    %51 = memref.load %arg2[%c1_43, %c2_44] : memref<4x4xf32, #tpu.memory_space<smem>>
    %52 = vector.broadcast %51 : f32 to vector<2x128xf32>
    %53 = arith.mulf %50, %52 : vector<2x128xf32>
    %54 = arith.addf %48, %53 : vector<2x128xf32>
    %c0_45 = arith.constant 0 : index
    %c3_46 = arith.constant 3 : index
    %c0_47 = arith.constant 0 : index
    %c0_48 = arith.constant 0 : index
    %55 = vector.load %arg4[%c0_45, %c3_46, %c0_47, %c0_48] : memref<1x4x2x128xf32, #tpu.memory_space<vmem>>, vector<1x1x2x128xf32>
    %56 = vector.shape_cast %55 : vector<1x1x2x128xf32> to vector<2x128xf32>
    %c1_49 = arith.constant 1 : index
    %c3_50 = arith.constant 3 : index
    %57 = memref.load %arg2[%c1_49, %c3_50] : memref<4x4xf32, #tpu.memory_space<smem>>
    %58 = vector.broadcast %57 : f32 to vector<2x128xf32>
    %59 = arith.mulf %56, %58 : vector<2x128xf32>
    %60 = arith.addf %54, %59 : vector<2x128xf32>
    %cst_51 = arith.constant 0.000000e+00 : f32
    %61 = vector.broadcast %cst_51 : f32 to vector<2x128xf32>
    %62 = arith.subf %61, %60 : vector<2x128xf32>
    %63 = math.exp %62 : vector<2x128xf32>
    %cst_52 = arith.constant 1.000000e+00 : f32
    %64 = vector.broadcast %cst_52 : f32 to vector<2x128xf32>
    %65 = arith.addf %64, %63 : vector<2x128xf32>
    %66 = tpu.reciprocal %65 {approx = true} : vector<2x128xf32> -> vector<2x128xf32>
    %c0_53 = arith.constant 0 : index
    %c1_54 = arith.constant 1 : index
    %c0_55 = arith.constant 0 : index
    %c0_56 = arith.constant 0 : index
    %67 = vector.load %arg5[%c0_53, %c1_54, %c0_55, %c0_56] : memref<1x4x2x128xf32, #tpu.memory_space<vmem>>, vector<1x1x2x128xf32>
    %68 = vector.shape_cast %67 : vector<1x1x2x128xf32> to vector<2x128xf32>
    %69 = vector.shape_cast %66 : vector<2x128xf32> to vector<1x1x2x128xf32>
    tpu.vector_store %arg5[%c0_53, %c1_54, %c0_55, %c0_56], %69 {strides = array<i32>} : memref<1x4x2x128xf32, #tpu.memory_space<vmem>>, vector<1x1x2x128xf32>,
    %c0_57 = arith.constant 0 : index
    %c0_58 = arith.constant 0 : index
    %c0_59 = arith.constant 0 : index
    %c0_60 = arith.constant 0 : index
    %70 = vector.load %arg4[%c0_57, %c0_58, %c0_59, %c0_60] : memref<1x4x2x128xf32, #tpu.memory_space<vmem>>, vector<1x1x2x128xf32>
    %71 = vector.shape_cast %70 : vector<1x1x2x128xf32> to vector<2x128xf32>
    %c2_61 = arith.constant 2 : index
    %c0_62 = arith.constant 0 : index
    %72 = memref.load %arg2[%c2_61, %c0_62] : memref<4x4xf32, #tpu.memory_space<smem>>
    %73 = vector.broadcast %72 : f32 to vector<2x128xf32>
    %74 = arith.mulf %71, %73 : vector<2x128xf32>
    %c2_63 = arith.constant 2 : index
    %75 = memref.load %arg3[%c2_63] : memref<4xf32, #tpu.memory_space<smem>>
    %76 = vector.broadcast %75 : f32 to vector<2x128xf32>
    %77 = arith.addf %74, %76 : vector<2x128xf32>
    %c0_64 = arith.constant 0 : index
    %c1_65 = arith.constant 1 : index
    %c0_66 = arith.constant 0 : index
    %c0_67 = arith.constant 0 : index
    %78 = vector.load %arg4[%c0_64, %c1_65, %c0_66, %c0_67] : memref<1x4x2x128xf32, #tpu.memory_space<vmem>>, vector<1x1x2x128xf32>
    %79 = vector.shape_cast %78 : vector<1x1x2x128xf32> to vector<2x128xf32>
    %c2_68 = arith.constant 2 : index
    %c1_69 = arith.constant 1 : index
    %80 = memref.load %arg2[%c2_68, %c1_69] : memref<4x4xf32, #tpu.memory_space<smem>>
    %81 = vector.broadcast %80 : f32 to vector<2x128xf32>
    %82 = arith.mulf %79, %81 : vector<2x128xf32>
    %83 = arith.addf %77, %82 : vector<2x128xf32>
    %c0_70 = arith.constant 0 : index
    %c2_71 = arith.constant 2 : index
    %c0_72 = arith.constant 0 : index
    %c0_73 = arith.constant 0 : index
    %84 = vector.load %arg4[%c0_70, %c2_71, %c0_72, %c0_73] : memref<1x4x2x128xf32, #tpu.memory_space<vmem>>, vector<1x1x2x128xf32>
    %85 = vector.shape_cast %84 : vector<1x1x2x128xf32> to vector<2x128xf32>
    %c2_74 = arith.constant 2 : index
    %c2_75 = arith.constant 2 : index
    %86 = memref.load %arg2[%c2_74, %c2_75] : memref<4x4xf32, #tpu.memory_space<smem>>
    %87 = vector.broadcast %86 : f32 to vector<2x128xf32>
    %88 = arith.mulf %85, %87 : vector<2x128xf32>
    %89 = arith.addf %83, %88 : vector<2x128xf32>
    %c0_76 = arith.constant 0 : index
    %c3_77 = arith.constant 3 : index
    %c0_78 = arith.constant 0 : index
    %c0_79 = arith.constant 0 : index
    %90 = vector.load %arg4[%c0_76, %c3_77, %c0_78, %c0_79] : memref<1x4x2x128xf32, #tpu.memory_space<vmem>>, vector<1x1x2x128xf32>
    %91 = vector.shape_cast %90 : vector<1x1x2x128xf32> to vector<2x128xf32>
    %c2_80 = arith.constant 2 : index
    %c3_81 = arith.constant 3 : index
    %92 = memref.load %arg2[%c2_80, %c3_81] : memref<4x4xf32, #tpu.memory_space<smem>>
    %93 = vector.broadcast %92 : f32 to vector<2x128xf32>
    %94 = arith.mulf %91, %93 : vector<2x128xf32>
    %95 = arith.addf %89, %94 : vector<2x128xf32>
    %cst_82 = arith.constant 0.000000e+00 : f32
    %96 = vector.broadcast %cst_82 : f32 to vector<2x128xf32>
    %97 = arith.subf %96, %95 : vector<2x128xf32>
    %98 = math.exp %97 : vector<2x128xf32>
    %cst_83 = arith.constant 1.000000e+00 : f32
    %99 = vector.broadcast %cst_83 : f32 to vector<2x128xf32>
    %100 = arith.addf %99, %98 : vector<2x128xf32>
    %101 = tpu.reciprocal %100 {approx = true} : vector<2x128xf32> -> vector<2x128xf32>
    %c0_84 = arith.constant 0 : index
    %c2_85 = arith.constant 2 : index
    %c0_86 = arith.constant 0 : index
    %c0_87 = arith.constant 0 : index
    %102 = vector.load %arg5[%c0_84, %c2_85, %c0_86, %c0_87] : memref<1x4x2x128xf32, #tpu.memory_space<vmem>>, vector<1x1x2x128xf32>
    %103 = vector.shape_cast %102 : vector<1x1x2x128xf32> to vector<2x128xf32>
    %104 = vector.shape_cast %101 : vector<2x128xf32> to vector<1x1x2x128xf32>
    tpu.vector_store %arg5[%c0_84, %c2_85, %c0_86, %c0_87], %104 {strides = array<i32>} : memref<1x4x2x128xf32, #tpu.memory_space<vmem>>, vector<1x1x2x128xf32>,
    %c0_88 = arith.constant 0 : index
    %c0_89 = arith.constant 0 : index
    %c0_90 = arith.constant 0 : index
    %c0_91 = arith.constant 0 : index
    %105 = vector.load %arg4[%c0_88, %c0_89, %c0_90, %c0_91] : memref<1x4x2x128xf32, #tpu.memory_space<vmem>>, vector<1x1x2x128xf32>
    %106 = vector.shape_cast %105 : vector<1x1x2x128xf32> to vector<2x128xf32>
    %c3_92 = arith.constant 3 : index
    %c0_93 = arith.constant 0 : index
    %107 = memref.load %arg2[%c3_92, %c0_93] : memref<4x4xf32, #tpu.memory_space<smem>>
    %108 = vector.broadcast %107 : f32 to vector<2x128xf32>
    %109 = arith.mulf %106, %108 : vector<2x128xf32>
    %c3_94 = arith.constant 3 : index
    %110 = memref.load %arg3[%c3_94] : memref<4xf32, #tpu.memory_space<smem>>
    %111 = vector.broadcast %110 : f32 to vector<2x128xf32>
    %112 = arith.addf %109, %111 : vector<2x128xf32>
    %c0_95 = arith.constant 0 : index
    %c1_96 = arith.constant 1 : index
    %c0_97 = arith.constant 0 : index
    %c0_98 = arith.constant 0 : index
    %113 = vector.load %arg4[%c0_95, %c1_96, %c0_97, %c0_98] : memref<1x4x2x128xf32, #tpu.memory_space<vmem>>, vector<1x1x2x128xf32>
    %114 = vector.shape_cast %113 : vector<1x1x2x128xf32> to vector<2x128xf32>
    %c3_99 = arith.constant 3 : index
    %c1_100 = arith.constant 1 : index
    %115 = memref.load %arg2[%c3_99, %c1_100] : memref<4x4xf32, #tpu.memory_space<smem>>
    %116 = vector.broadcast %115 : f32 to vector<2x128xf32>
    %117 = arith.mulf %114, %116 : vector<2x128xf32>
    %118 = arith.addf %112, %117 : vector<2x128xf32>
    %c0_101 = arith.constant 0 : index
    %c2_102 = arith.constant 2 : index
    %c0_103 = arith.constant 0 : index
    %c0_104 = arith.constant 0 : index
    %119 = vector.load %arg4[%c0_101, %c2_102, %c0_103, %c0_104] : memref<1x4x2x128xf32, #tpu.memory_space<vmem>>, vector<1x1x2x128xf32>
    %120 = vector.shape_cast %119 : vector<1x1x2x128xf32> to vector<2x128xf32>
    %c3_105 = arith.constant 3 : index
    %c2_106 = arith.constant 2 : index
    %121 = memref.load %arg2[%c3_105, %c2_106] : memref<4x4xf32, #tpu.memory_space<smem>>
    %122 = vector.broadcast %121 : f32 to vector<2x128xf32>
    %123 = arith.mulf %120, %122 : vector<2x128xf32>
    %124 = arith.addf %118, %123 : vector<2x128xf32>
    %c0_107 = arith.constant 0 : index
    %c3_108 = arith.constant 3 : index
    %c0_109 = arith.constant 0 : index
    %c0_110 = arith.constant 0 : index
    %125 = vector.load %arg4[%c0_107, %c3_108, %c0_109, %c0_110] : memref<1x4x2x128xf32, #tpu.memory_space<vmem>>, vector<1x1x2x128xf32>
    %126 = vector.shape_cast %125 : vector<1x1x2x128xf32> to vector<2x128xf32>
    %c3_111 = arith.constant 3 : index
    %c3_112 = arith.constant 3 : index
    %127 = memref.load %arg2[%c3_111, %c3_112] : memref<4x4xf32, #tpu.memory_space<smem>>
    %128 = vector.broadcast %127 : f32 to vector<2x128xf32>
    %129 = arith.mulf %126, %128 : vector<2x128xf32>
    %130 = arith.addf %124, %129 : vector<2x128xf32>
    %cst_113 = arith.constant 0.000000e+00 : f32
    %131 = vector.broadcast %cst_113 : f32 to vector<2x128xf32>
    %132 = arith.subf %131, %130 : vector<2x128xf32>
    %133 = math.exp %132 : vector<2x128xf32>
    %cst_114 = arith.constant 1.000000e+00 : f32
    %134 = vector.broadcast %cst_114 : f32 to vector<2x128xf32>
    %135 = arith.addf %134, %133 : vector<2x128xf32>
    %136 = tpu.reciprocal %135 {approx = true} : vector<2x128xf32> -> vector<2x128xf32>
    %c0_115 = arith.constant 0 : index
    %c3_116 = arith.constant 3 : index
    %c0_117 = arith.constant 0 : index
    %c0_118 = arith.constant 0 : index
    %137 = vector.load %arg5[%c0_115, %c3_116, %c0_117, %c0_118] : memref<1x4x2x128xf32, #tpu.memory_space<vmem>>, vector<1x1x2x128xf32>
    %138 = vector.shape_cast %137 : vector<1x1x2x128xf32> to vector<2x128xf32>
    %139 = vector.shape_cast %136 : vector<2x128xf32> to vector<1x1x2x128xf32>
    tpu.vector_store %arg5[%c0_115, %c3_116, %c0_117, %c0_118], %139 {strides = array<i32>} : memref<1x4x2x128xf32, #tpu.memory_space<vmem>>, vector<1x1x2x128xf32>,
    return
  }
  func.func @transform_0(%arg0: i32, %arg1: i32, %arg2: memref<4x4xf32, #tpu.memory_space<smem>>, %arg3: memref<4xf32, #tpu.memory_space<smem>>) -> (i32, i32, i32, i32) {
    %c0_i32 = arith.constant 0 : i32
    %c0_i32_0 = arith.constant 0 : i32
    %c0_i32_1 = arith.constant 0 : i32
    return %arg1, %c0_i32, %arg0, %c0_i32_0 : i32, i32, i32, i32
  }
  func.func @transform_1(%arg0: i32, %arg1: i32, %arg2: memref<4x4xf32, #tpu.memory_space<smem>>, %arg3: memref<4xf32, #tpu.memory_space<smem>>) -> (i32, i32, i32, i32) {
    %c0_i32 = arith.constant 0 : i32
    %c0_i32_0 = arith.constant 0 : i32
    %c0_i32_1 = arith.constant 0 : i32
    return %arg1, %c0_i32, %arg0, %c0_i32_0 : i32, i32, i32, i32
  }
}

</mosaic_0001>

<llo_original>
// kernel: tpu_custom_call.1
$region0: #{tpu_custom_call.1}
  #allocation0 [shape = 'u32[]', space=smem, size = 0x4, offset = 0x4, fixed_abs, tag = 'smem constant byte address 0x4 - core index']
  #allocation1 [shape = 'u32[72,128]{1,0:T(1,128)}', space=vmem, size = 0x9000, scoped, tag = 'internal scratch']
  #allocation2 [shape = 's32[1]{0}', space=sflag, size = 0x4, scoped, tag = 'scoped memory for tpu_custom_call.1']
  #allocation3 [shape = 'u8[2048]{0}', space=smem, size = 0x800, scoped, tag = 'prefetched SMEM operand 0']
  #allocation4 [shape = 'u8[512]{0}', space=smem, size = 0x200, scoped, tag = 'prefetched SMEM operand 1']
  %s0 = inlined_call_operand.hbm [shape: f32[4,4], index: 0, kind: input, shape index: {}]
  %s1 = inlined_call_operand.hbm [shape: f32[4], index: 1, kind: input, shape index: {}]
  %s2 = inlined_call_operand.hbm [shape: f32[2,4,2,128], index: 2, kind: input, shape index: {}]
  %s3 = inlined_call_operand.hbm [shape: f32[2,4,2,128], index: 3, kind: output, shape index: {}]
  %s4 = sld [smem:[#allocation0]]
  $region41: #{tpu_custom_call.1} parent=0
    _
  %s6 = ssub.s32 1, %s4
  %s7 = scalar_select 0, %s6, %s4
  %s9 = sshll.u32 %s0, 4
  %s10 = int_to_ptr.hbm [resolvable:$true] %s9
  %12 = dma.hbm_to_smem %s10, 64, [#allocation3], [#allocation2]
  %s14 = sshll.u32 %s1, 4
  %s15 = int_to_ptr.hbm [resolvable:$true] %s14
  %17 = dma.hbm_to_smem %s15, 16, [#allocation4], [#allocation2]
  %19 = dma.done [#allocation2], 80
  %20 = sfence
  $region1: #{tpu_custom_call.1} parent=0
    #allocation5 [shape = 'u8[8192]{0}', space=vmem, size = 0x2000, scoped, tag = 'input window, operand 2']
    #allocation6 [shape = 's32[2]{0}', space=sflag, size = 0x8, scoped, tag = 'scoped memory for tpu_custom_call.1']
    #allocation7 [shape = 's32[2]{0}', space=sflag, size = 0x8, scoped, tag = 'scoped memory for tpu_custom_call.1']
    #allocation8 [shape = 'u8[8192]{0}', space=vmem, size = 0x2000, scoped, tag = 'output window, operand 0']
    %21 = vsyncpa [#allocation6], 0
    %s22 = scalar_lea.sflag [#allocation6], 1
    %23 = vsyncpa %s22, 0
    %24 = vsyncpa [#allocation7], 0
    %s25 = scalar_lea.sflag [#allocation7], 1
    %26 = vsyncpa %s25, 0
    loop: start=0, step=1, limit=4
    $region2: #{tpu_custom_call.1} parent=1 // loop_pre_header
      _
    $region3: #{tpu_custom_call.1} parent=1 // loop_header
      %s28 = sphi 0, %s32
      %p29 = scmp.ge.s32.totalorder %s28, 4
      %s35 = sphi 0, %s47
      %s36 = sphi 0, %s43
      %s37 = sphi 0, %s35
      %s38 = sphi 0, %s36
      %s39 = sphi 0, %s37
      %s40 = sphi 0, %s38
      %s52 = sphi 0, %s54
      %s55 = sphi 0, %s52
      %s56 = sphi 0, %s55
      %s72 = sphi 0, %s56
      %s80 = sphi 0, %s82
      %s83 = sphi 0, %s80
      %s84 = sphi 0, %s83
      %s100 = sphi 0, %s84
    $region4: #{tpu_custom_call.1} parent=1 // loop_header_branch
      %31 = sbr.rel (%p29) target = $region8
    $region5: #{tpu_custom_call.1} parent=1 // loop_body
      %s33 = ssub.s32 %s28, 1
      %s34 = ssub.s32 %s28, 2
      %s41 = sadd.s32 1, %s36
      %p42 = scmp.ge.s32.totalorder %s41, 2
      %s43 = scalar_select %p42, 0, %s41
      %s44 = sadd.s32 1, %s35
      %s45 = scalar_select %p42, %s44, %s35
      %p46 = scmp.ge.s32.totalorder %s45, 1
      %s47 = scalar_select %p46, 0, %s45
      %s48 = ssub.s32 %s36, %s43
      %s49 = ssub.s32 %s35, %s47
      %s50 = sor.u32 %s48, %s49
      %p51 = scmp.eq.s32.totalorder %s50, 0
      %s53 = sadd.s32 %s52, 1
      %s54 = scalar_select %p51, %s52, %s53
      %p57 = pneg %p51
      %p58 = scmp.eq.s32.totalorder %s28, 1
      %p59 = por %p57, %p58
      %p60 = scmp.ne.s32.totalorder %s52, %s55
      %p61 = scmp.eq.s32.totalorder %s28, 0
      %p62 = por %p60, %p61
      %p63 = scmp.ne.s32.totalorder %s52, %s55
      %p64 = scmp.eq.s32.totalorder %s33, 1
      %p65 = por %p63, %p64
      %p66 = scmp.ne.s32.totalorder %s55, %s56
      %p67 = scmp.eq.s32.totalorder %s33, 0
      %p68 = por %p66, %p67
      %p69 = scmp.ne.s32.totalorder %s55, %s56
      %p70 = scmp.eq.s32.totalorder %s34, 1
      %p71 = por %p69, %p70
      %p73 = scmp.ne.s32.totalorder %s56, %s72
      %p74 = scmp.eq.s32.totalorder %s34, 0
      %p75 = por %p73, %p74
      %s76 = ssub.s32 %s36, %s43
      %s77 = ssub.s32 %s35, %s47
      %s78 = sor.u32 %s76, %s77
      %p79 = scmp.eq.s32.totalorder %s78, 0
      %s81 = sadd.s32 %s80, 1
      %s82 = scalar_select %p79, %s80, %s81
      %p85 = pneg %p79
      %p86 = scmp.eq.s32.totalorder %s28, 1
      %p87 = por %p85, %p86
      %p88 = scmp.ne.s32.totalorder %s80, %s83
      %p89 = scmp.eq.s32.totalorder %s28, 0
      %p90 = por %p88, %p89
      %p91 = scmp.ne.s32.totalorder %s80, %s83
      %p92 = scmp.eq.s32.totalorder %s33, 1
      %p93 = por %p91, %p92
      %p94 = scmp.ne.s32.totalorder %s83, %s84
      %p95 = scmp.eq.s32.totalorder %s33, 0
      %p96 = por %p94, %p95
      %p97 = scmp.ne.s32.totalorder %s83, %s84
      %p98 = scmp.eq.s32.totalorder %s34, 1
      %p99 = por %p97, %p98
      %p101 = scmp.ne.s32.totalorder %s84, %s100
      %p102 = scmp.eq.s32.totalorder %s34, 0
      %p103 = por %p101, %p102
      %p104 = scmp.le.s32.totalorder 1, %s28
      %p105 = scmp.lt.s32.totalorder %s28, 3
      %p106 = pnand %p104, %p105
      %p107 = pneg %p106
      // Predicated region
      $region9: #{tpu_custom_call.1} parent=5 // pred_check
        _
      $region10: #{tpu_custom_call.1} parent=5 // pred_check_branch
        %109 = sbr.rel (%p106) target = $region12
      $region11: #{tpu_custom_call.1} parent=5 // pred_region
        %s110 = ssub.s32 %s28, 1
      $region12: #{tpu_custom_call.1} parent=5 // pred_fallthru
        _
      %p111 = scmp.lt.s32.totalorder %s28, 2
      // Predicated region
      $region13: #{tpu_custom_call.1} parent=5 // pred_check
        %p112 = pneg %p111
      $region14: #{tpu_custom_call.1} parent=5 // pred_check_branch
        %114 = sbr.rel (%p112) target = $region16
      $region15: #{tpu_custom_call.1} parent=5 // pred_region
        // Predicated region
        $region17: #{tpu_custom_call.1} parent=15 // pred_check
          %p115 = pneg %p62
        $region18: #{tpu_custom_call.1} parent=15 // pred_check_branch
          %117 = sbr.rel (%p115) target = $region20
        $region19: #{tpu_custom_call.1} parent=15 // pred_region
          %s118 = sand.u32 %s52, 1
          %s119 = scalar_lea.sflag [#allocation6], %s118
          %s120 = sand.u32 %s52, 1
          %s121 = smul.addr %s120, 8
          %s122 = scalar_lea.vmem [#allocation5], %s121
          %124 = vsyncadd %s119, 0
          %s125 = smul.addr %s36, 4
          %s126 = sadd.s32 %s35, %s125
          %s127 = smul.addr %s126, 2
          %s128 = scalar_lea.hbm %s2, %s127
          %s129 = sshll.u32 %s128, 4
          %s130 = int_to_ptr.hbm [resolvable:$true] %s129
          %s131 = sshll.u32 %s122, 4
          %s132 = int_to_ptr.vmem [resolvable:$true] %s131
          %137 = dma.hbm_to_vmem [thread:$0]  %s130, 128, %s132, %s119, 32, 32, 2
        $region20: #{tpu_custom_call.1} parent=15 // pred_fallthru
          _
      $region16: #{tpu_custom_call.1} parent=5 // pred_fallthru
        _
      %p138 = scmp.le.s32.totalorder 1, %s28
      %p139 = scmp.lt.s32.totalorder %s28, 3
      %p140 = pnand %p138, %p139
      %p141 = pneg %p140
      // Predicated region
      $region21: #{tpu_custom_call.1} parent=5 // pred_check
        _
      $region22: #{tpu_custom_call.1} parent=5 // pred_check_branch
        %143 = sbr.rel (%p140) target = $region24
      $region23: #{tpu_custom_call.1} parent=5 // pred_region
        %s144 = ssub.s32 %s28, 1
        %s145 = sand.u32 %s55, 1
        %s146 = scalar_lea.sflag [#allocation6], %s145
        %s147 = sand.u32 %s55, 1
        %s148 = smul.addr %s147, 8
        %s149 = scalar_lea.vmem [#allocation5], %s148
        // Predicated region
        $region25: #{tpu_custom_call.1} parent=23 // pred_check
          %p150 = pneg %p68
        $region26: #{tpu_custom_call.1} parent=23 // pred_check_branch
          %152 = sbr.rel (%p150) target = $region28
        $region27: #{tpu_custom_call.1} parent=23 // pred_region
          %154 = dma.done %s146, 128
        $region28: #{tpu_custom_call.1} parent=23 // pred_fallthru
          _
        %s155 = sand.u32 %s55, 1
        %s156 = scalar_lea.sflag [#allocation6], %s155
        %s157 = sand.u32 %s55, 1
        %s158 = smul.addr %s157, 8
        %s159 = scalar_lea.vmem [#allocation5], %s158
        %p160 = pneg %p68
        %p161 = pneg %p65
        %p162 = pneg %p96
        %p163 = pneg %p93
        %s164 = sand.u32 %s83, 1
        %s165 = scalar_lea.sflag [#allocation7], %s164
        %s166 = sand.u32 %s83, 1
        %s167 = smul.addr %s166, 8
        %s168 = scalar_lea.vmem [#allocation8], %s167
        %v169 = vld [vmem:[%s149] sm:$0x3]
        %s170 = sld [smem:[#allocation3]]
        %v171 = vstv %s170
        %v172 = vmul.f32 %v169, %v171
        %s173 = sld [smem:[#allocation4]]
        %v174 = vstv %s173
        %v175 = vadd.f32 %v172, %v174
        %s176 = scalar_lea.vmem %s149, 2 [#allocation5]
        %v177 = vld [vmem:[%s176] sm:$0x3]
        %s178 = sld [smem:[#allocation3 + $0x1]]
        %v179 = vstv %s178
        %v180 = vmul.f32 %v177, %v179
        %v181 = vadd.f32 %v175, %v180
        %s182 = scalar_lea.vmem %s149, 4 [#allocation5]
        %v183 = vld [vmem:[%s182] sm:$0x3]
        %s184 = sld [smem:[#allocation3 + $0x2]]
        %v185 = vstv %s184
        %v186 = vmul.f32 %v183, %v185
        %v187 = vadd.f32 %v181, %v186
        %s188 = scalar_lea.vmem %s149, 6 [#allocation5]
        %v189 = vld [vmem:[%s188] sm:$0x3]
        %s190 = sld [smem:[#allocation3 + $0x3]]
        %v191 = vstv %s190
        %v192 = vmul.f32 %v189, %v191
        %v193 = vadd.f32 %v187, %v192
        %v194 = vsub.f32 0.0, %v193
        %v195 = vmul.f32 %v194, 1.442695
        %v196 = vpow.pop %v195
        %v197 = vadd.f32 %v196, 1.0
        %v198 = vrcp.pop %v197
        %199 = vst [vmem:[%s168] sm:$0x3] %v198
        %v200 = vld [vmem:[%s149] sm:$0x3]
        %s201 = sld [smem:[#allocation3 + $0x80]]
        %v202 = vstv %s201
        %v203 = vmul.f32 %v200, %v202
        %s204 = sld [smem:[#allocation4 + $0x1]]
        %v205 = vstv %s204
        %v206 = vadd.f32 %v203, %v205
        %v207 = vld [vmem:[%s176] sm:$0x3]
        %s208 = sld [smem:[#allocation3 + $0x81]]
        %v209 = vstv %s208
        %v210 = vmul.f32 %v207, %v209
        %v211 = vadd.f32 %v206, %v210
        %v212 = vld [vmem:[%s182] sm:$0x3]
        %s213 = sld [smem:[#allocation3 + $0x82]]
        %v214 = vstv %s213
        %v215 = vmul.f32 %v212, %v214
        %v216 = vadd.f32 %v211, %v215
        %v217 = vld [vmem:[%s188] sm:$0x3]
        %s218 = sld [smem:[#allocation3 + $0x83]]
        %v219 = vstv %s218
        %v220 = vmul.f32 %v217, %v219
        %v221 = vadd.f32 %v216, %v220
        %v222 = vsub.f32 0.0, %v221
        %v223 = vmul.f32 %v222, 1.442695
        %v224 = vpow.pop %v223
        %v225 = vadd.f32 %v224, 1.0
        %v226 = vrcp.pop %v225
        %s227 = scalar_lea.vmem %s168, 2 [#allocation8]
        %228 = vst [vmem:[%s227] sm:$0x3] %v226
        %v229 = vld [vmem:[%s149] sm:$0x3]
        %s230 = sld [smem:[#allocation3 + $0x100]]
        %v231 = vstv %s230
        %v232 = vmul.f32 %v229, %v231
        %s233 = sld [smem:[#allocation4 + $0x2]]
        %v234 = vstv %s233
        %v235 = vadd.f32 %v232, %v234
        %v236 = vld [vmem:[%s176] sm:$0x3]
        %s237 = sld [smem:[#allocation3 + $0x101]]
        %v238 = vstv %s237
        %v239 = vmul.f32 %v236, %v238
        %v240 = vadd.f32 %v235, %v239
        %v241 = vld [vmem:[%s182] sm:$0x3]
        %s242 = sld [smem:[#allocation3 + $0x102]]
        %v243 = vstv %s242
        %v244 = vmul.f32 %v241, %v243
        %v245 = vadd.f32 %v240, %v244
        %v246 = vld [vmem:[%s188] sm:$0x3]
        %s247 = sld [smem:[#allocation3 + $0x103]]
        %v248 = vstv %s247
        %v249 = vmul.f32 %v246, %v248
        %v250 = vadd.f32 %v245, %v249
        %v251 = vsub.f32 0.0, %v250
        %v252 = vmul.f32 %v251, 1.442695
        %v253 = vpow.pop %v252
        %v254 = vadd.f32 %v253, 1.0
        %v255 = vrcp.pop %v254
        %s256 = scalar_lea.vmem %s168, 4 [#allocation8]
        %257 = vst [vmem:[%s256] sm:$0x3] %v255
        %v258 = vld [vmem:[%s149] sm:$0x3]
        %s259 = sld [smem:[#allocation3 + $0x180]]
        %v260 = vstv %s259
        %v261 = vmul.f32 %v258, %v260
        %s262 = sld [smem:[#allocation4 + $0x3]]
        %v263 = vstv %s262
        %v264 = vadd.f32 %v261, %v263
        %v265 = vld [vmem:[%s176] sm:$0x3]
        %s266 = sld [smem:[#allocation3 + $0x181]]
        %v267 = vstv %s266
        %v268 = vmul.f32 %v265, %v267
        %v269 = vadd.f32 %v264, %v268
        %v270 = vld [vmem:[%s182] sm:$0x3]
        %s271 = sld [smem:[#allocation3 + $0x182]]
        %v272 = vstv %s271
        %v273 = vmul.f32 %v270, %v272
        %v274 = vadd.f32 %v269, %v273
        %v275 = vld [vmem:[%s188] sm:$0x3]
        %s276 = sld [smem:[#allocation3 + $0x183]]
        %v277 = vstv %s276
        %v278 = vmul.f32 %v275, %v277
        %v279 = vadd.f32 %v274, %v278
        %v280 = vsub.f32 0.0, %v279
        %v281 = vmul.f32 %v280, 1.442695
        %v282 = vpow.pop %v281
        %v283 = vadd.f32 %v282, 1.0
        %v284 = vrcp.pop %v283
        %s285 = scalar_lea.vmem %s168, 6 [#allocation8]
        %286 = vst [vmem:[%s285] sm:$0x3] %v284
        %s287 = sand.u32 %s83, 1
        %s288 = scalar_lea.sflag [#allocation7], %s287
        %s289 = sand.u32 %s83, 1
        %s290 = smul.addr %s289, 8
        %s291 = scalar_lea.vmem [#allocation8], %s290
        // Predicated region
        $region29: #{tpu_custom_call.1} parent=23 // pred_check
          %p292 = pneg %p93
        $region30: #{tpu_custom_call.1} parent=23 // pred_check_branch
          %294 = sbr.rel (%p292) target = $region32
        $region31: #{tpu_custom_call.1} parent=23 // pred_region
          %296 = vsyncadd %s288, 0
          %s297 = smul.addr %s38, 4
          %s298 = sadd.s32 %s37, %s297
          %s299 = smul.addr %s298, 2
          %s300 = scalar_lea.hbm %s3, %s299
          %s301 = sshll.u32 %s291, 4
          %s302 = int_to_ptr.vmem [resolvable:$true] %s301
          %s303 = sshll.u32 %s300, 4
          %s304 = int_to_ptr.hbm [resolvable:$true] %s303
          %309 = dma.vmem_to_hbm [thread:$0]  %s302, 128, %s304, %s288, 32, 32, 2
        $region32: #{tpu_custom_call.1} parent=23 // pred_fallthru
          _
      $region24: #{tpu_custom_call.1} parent=5 // pred_fallthru
        _
      %p310 = scmp.le.s32.totalorder 2, %s28
      // Predicated region
      $region33: #{tpu_custom_call.1} parent=5 // pred_check
        %p311 = pneg %p310
      $region34: #{tpu_custom_call.1} parent=5 // pred_check_branch
        %313 = sbr.rel (%p311) target = $region36
      $region35: #{tpu_custom_call.1} parent=5 // pred_region
        %s314 = ssub.s32 %s28, 2
        // Predicated region
        $region37: #{tpu_custom_call.1} parent=35 // pred_check
          %p315 = pneg %p99
        $region38: #{tpu_custom_call.1} parent=35 // pred_check_branch
          %317 = sbr.rel (%p315) target = $region40
        $region39: #{tpu_custom_call.1} parent=35 // pred_region
          %s318 = sand.u32 %s84, 1
          %s319 = scalar_lea.sflag [#allocation7], %s318
          %s320 = sand.u32 %s84, 1
          %s321 = smul.addr %s320, 8
          %s322 = scalar_lea.vmem [#allocation8], %s321
          %324 = dma.done %s319, 128
        $region40: #{tpu_custom_call.1} parent=35 // pred_fallthru
          _
      $region36: #{tpu_custom_call.1} parent=5 // pred_fallthru
        _
    $region6: #{tpu_custom_call.1} parent=1 // loop_footer
      %s32 = sadd.s32 1, %s28
    $region7: #{tpu_custom_call.1} parent=1 // loop_footer_branch
      %27 = sbr.rel target = $region3
    $region8: #{tpu_custom_call.1} parent=1 // loop_exit
      _
    %325 = vsyncpa [#allocation6], 1
    %s326 = scalar_lea.sflag [#allocation6], 1
    %327 = vsyncpa %s326, 1
    %328 = vsyncpa [#allocation7], 1
    %s329 = scalar_lea.sflag [#allocation7], 1
    %330 = vsyncpa %s329, 1

</llo_original>
